<compile_context>
chip_gen: v5e
topology: v5e:2x2
jax: 0.10.0
libtpu: 0.0.40
codegen_flags: <defaults>
</compile_context>

<pallas_src>
import jax
import jax.numpy as jnp
from jax.experimental import pallas as pl
from jax.experimental.pallas import tpu as pltpu


def _round_up(a, b):
    return (a + b - 1) // b * b


# ----------------------------- Pallas kernels ------------------------------

def _convgemm_stats_kernel(w_ref, p_ref, conv_ref, sum_ref, sq_ref):
    """Transposed-conv GEMM (4*oc, K) @ (K, tm) with fused per-row sum / sum-of-squares."""
    @pl.when(pl.program_id(0) == 0)
    def _():
        sum_ref[...] = jnp.zeros_like(sum_ref)
        sq_ref[...] = jnp.zeros_like(sq_ref)

    acc = jnp.dot(w_ref[...], p_ref[...], preferred_element_type=jnp.float32)  # (4*oc, tm) f32
    conv_ref[...] = acc
    # Stats are cheap VPU/XLU filler hidden under the GEMM's DMA (lane reduction -> (4*oc, 1)).
    sum_ref[...] += jnp.sum(acc, axis=1, keepdims=True)
    sq_ref[...] += jnp.sum(acc * acc, axis=1, keepdims=True)


def _bn_relu_kernel(x_ref, scale_ref, shift_ref, o_ref):
    """y = relu(x * scale + shift); scale/shift broadcast along the lane (M) axis."""
    y = x_ref[...] * scale_ref[...] + shift_ref[...]
    o_ref[...] = jnp.maximum(y, 0.0)


# ------------------------------ forward pass -------------------------------

def up_forward(x, w, gamma, beta, *, eps=1e-5, tm=2048, gemm_dtype=jnp.bfloat16):
    """x: (N, ic, H, W) NCHW. w: (ic, oc, 4, 4) ConvTranspose2d weight.
    Returns (N, oc, 2H, 2W) = ReLU(BatchNorm2d(ConvTranspose2d(x))) with training-mode
    (batch) statistics, matching nn.Sequential(ConvT, BN, ReLU)."""
    x = x.astype(jnp.float32)
    w = w.astype(jnp.float32)
    N, ic, H, W = x.shape
    _, oc, kh, kw = w.shape
    assert (kh, kw) == (4, 4)
    Ho, Wo = 2 * H, 2 * W

    # ---- glue: 3x3 neighbourhood gather at original resolution, built directly (K, M)
    xp = jnp.pad(x, ((0, 0), (0, 0), (1, 1), (1, 1)))                      # (N, ic, H+2, W+2)
    shifts = [xp[:, :, sy:sy + H, sx:sx + W] for sy in range(3) for sx in range(3)]
    patches_t = jnp.stack(shifts, axis=0)                                  # (9, N, ic, H, W)
    patches_t = patches_t.transpose(0, 2, 1, 3, 4).reshape(9 * ic, N * H * W)   # K=(sy,sx,ci)
    # TODO(synk): gather the 3x3 neighbourhood inside the GEMM kernel (shifted loads on a
    # resident padded image) so patches_t never materializes in HBM.

    # ---- glue: phase-decomposed weight matrix (4*oc, 9*ic)
    # y[n,co,2a+py,2b+px] = sum_{ci, sy in {py,py+1}, sx in {px,px+1}}
    #                         xp[n,ci,a+sy,b+sx] * w[ci,co,py+3-2sy,px+3-2sx]
    R = 4 * oc                      # rows = (phase py,px) x channel
    K = 9 * ic
    wmat = jnp.zeros((R, K), jnp.float32)
    for py in range(2):
        for px in range(2):
            for sy in range(py, py + 2):
                for sx in range(px, px + 2):
                    ky, kx = py + 3 - 2 * sy, px + 3 - 2 * sx
                    r0 = (2 * py + px) * oc
                    c0 = (3 * sy + sx) * ic
                    wmat = wmat.at[r0:r0 + oc, c0:c0 + ic].set(w[:, :, ky, kx].T)

    M = N * H * W
    tm = max(128, min(_round_up(tm, 128), _round_up(M, 128)))
    Mp = _round_up(M, tm)
    if Mp != M:
        # zero columns -> zero conv columns -> contribute nothing to the fused sums
        patches_t = jnp.pad(patches_t, ((0, 0), (0, Mp - M)))
    grid = (Mp // tm,)

    patches_t = patches_t.astype(gemm_dtype)     # bf16 on the MXU path only
    wmat_g = wmat.astype(gemm_dtype)

    # ---- Pallas kernel 1: transposed-conv GEMM + fused BatchNorm statistics
    conv, row_sum, row_sq = pl.pallas_call(
        _convgemm_stats_kernel,
        out_shape=(
            jax.ShapeDtypeStruct((R, Mp), jnp.float32),
            jax.ShapeDtypeStruct((R, 1), jnp.float32),
            jax.ShapeDtypeStruct((R, 1), jnp.float32),
        ),
        grid=grid,
        in_specs=[
            pl.BlockSpec((R, K), lambda i: (0, 0)),      # small weight matrix, resident
            pl.BlockSpec((K, tm), lambda i: (0, i)),     # lane-dense M tiles
        ],
        out_specs=(
            pl.BlockSpec((R, tm), lambda i: (0, i)),     # lane-dense conv activation
            pl.BlockSpec((R, 1), lambda i: (0, 0)),      # resident stats accumulators
            pl.BlockSpec((R, 1), lambda i: (0, 0)),
        ),
        compiler_params=pltpu.CompilerParams(dimension_semantics=("arbitrary",)),
    )(wmat_g, patches_t)

    # ---- tiny per-channel glue: BatchNorm2d training-mode (biased variance over N*Ho*Wo)
    # NOTE: E[x^2]-E[x]^2 in f32 — fine at these magnitudes; use a centered pass if reused
    # with much larger activations.
    cnt = 4.0 * M                                   # = N * Ho * Wo
    ch_sum = row_sum.reshape(4, oc).sum(axis=0)
    ch_sq = row_sq.reshape(4, oc).sum(axis=0)
    mean = ch_sum / cnt
    var = ch_sq / cnt - mean * mean
    inv = gamma.astype(jnp.float32) / jnp.sqrt(var + eps)
    scale = jnp.tile(inv, 4).reshape(R, 1)
    shift = jnp.tile(beta.astype(jnp.float32) - mean * inv, 4).reshape(R, 1)

    # ---- Pallas kernel 2: normalize + affine + ReLU (lane-dense (R, tm) tiles)
    y = pl.pallas_call(
        _bn_relu_kernel,
        out_shape=jax.ShapeDtypeStruct((R, Mp), jnp.float32),
        grid=grid,
        in_specs=[
            pl.BlockSpec((R, tm), lambda i: (0, i)),
            pl.BlockSpec((R, 1), lambda i: (0, 0)),
            pl.BlockSpec((R, 1), lambda i: (0, 0)),
        ],
        out_specs=pl.BlockSpec((R, tm), lambda i: (0, i)),
        compiler_params=pltpu.CompilerParams(dimension_semantics=("parallel",)),
    )(conv, scale, shift)

    # ---- glue: interleave the 4 parity phases and return NCHW
    # TODO(synk): stride-2 phase interleave has no clean BlockSpec expression; kept as glue.
    y = y[:, :M].reshape(2, 2, oc, N, H, W)          # (py, px, co, n, a, b)
    y = y.transpose(3, 2, 4, 0, 5, 1)                # (n, co, a, py, b, px)
    return y.reshape(N, oc, Ho, Wo)


# ------------------------------ pure-JAX reference ------------------------------

def up_reference(x, w, gamma, beta, eps=1e-5):
    N, ic, H, W = x.shape
    _, oc, kh, kw = w.shape
    Ho, Wo = 2 * H, 2 * W
    contrib = jnp.einsum("ncij,cokl->noijkl", x, w)              # (N, oc, H, W, 4, 4)
    buf = jnp.zeros((N, oc, Ho + 2, Wo + 2), jnp.float32)
    for ky in range(kh):
        for kx in range(kw):
            buf = buf.at[:, :, ky:ky + Ho:2, kx:kx + Wo:2].add(contrib[..., ky, kx])
    conv = buf[:, :, 1:Ho + 1, 1:Wo + 1]
    mean = conv.mean(axis=(0, 2, 3), keepdims=True)
    var = ((conv - mean) ** 2).mean(axis=(0, 2, 3), keepdims=True)
    yn = (conv - mean) / jnp.sqrt(var + eps)
    yn = yn * gamma.reshape(1, oc, 1, 1) + beta.reshape(1, oc, 1, 1)
    return jnp.maximum(yn, 0.0)


# ----------------------------------- main -----------------------------------

if __name__ == "__main__":
    N, ic, oc, H, W = 2, 4, 8, 16, 16

    key = jax.random.PRNGKey(0)
    k_x, k_w, k_g, k_b = jax.random.split(key, 4)
    x = jax.random.normal(k_x, (N, ic, H, W), jnp.float32)
    w = 0.1 * jax.random.normal(k_w, (ic, oc, 4, 4), jnp.float32)   # ConvTranspose2d weight
    gamma = 1.0 + 0.1 * jax.random.normal(k_g, (oc,), jnp.float32)  # BatchNorm2d weight
    beta = 0.1 * jax.random.normal(k_b, (oc,), jnp.float32)         # BatchNorm2d bias

    ref = up_reference(x, w, gamma, beta)

    # f32-GEMM path: tight check against the pure-JAX reference.
    out_f32 = jax.block_until_ready(up_forward(x, w, gamma, beta, gemm_dtype=jnp.float32))
    assert out_f32.shape == (N, oc, 2 * H, 2 * W), out_f32.shape
    if not jnp.allclose(out_f32, ref, rtol=1e-3, atol=1e-3):
        raise AssertionError(
            f"f32 mismatch: max abs err = {float(jnp.max(jnp.abs(out_f32 - ref)))}")

    # default bf16-GEMM path (f32 accumulate): looser tolerance for bf16 input rounding.
    out = jax.block_until_ready(up_forward(x, w, gamma, beta))
    assert out.shape == (N, oc, 2 * H, 2 * W), out.shape
    if not jnp.allclose(out, ref, rtol=5e-2, atol=5e-2):
        raise AssertionError(
            f"bf16 mismatch: max abs err = {float(jnp.max(jnp.abs(out - ref)))}")

    print("KERNEL_OK")
</pallas_src>

<mosaic_0001>
module attributes {stable_mosaic.version = 11 : i64} {
  func.func @_convgemm_stats_kernel(%arg0: i32, %arg1: memref<32x36xf32, #tpu.memory_space<vmem>>, %arg2: memref<36x512xf32, #tpu.memory_space<vmem>>, %arg3: memref<32x512xf32, #tpu.memory_space<vmem>>, %arg4: memref<32x1xf32, #tpu.memory_space<vmem>>, %arg5: memref<32x1xf32, #tpu.memory_space<vmem>>) attributes {dimension_semantics = [#tpu.dimension_semantics<arbitrary>], iteration_bounds = array<i64: 1>, scalar_prefetch = 0 : i64, scratch_operands = 0 : i64, tpu.core_type = #tpu.core_type<tc>, window_params = [{pipeline_mode = #tpu.pipeline_mode<synchronous>, transform_indices = @transform_0, window_bounds = array<i64: 32, 36>}, {transform_indices = @transform_1, window_bounds = array<i64: 36, 512>}, {transform_indices = @transform_2, window_bounds = array<i64: 32, 512>}, {pipeline_mode = #tpu.pipeline_mode<synchronous>, transform_indices = @transform_3, window_bounds = array<i64: 32, 1>}, {pipeline_mode = #tpu.pipeline_mode<synchronous>, transform_indices = @transform_4, window_bounds = array<i64: 32, 1>}]} {
    %c0_i32 = arith.constant 0 : i32
    %0 = arith.cmpi eq, %arg0, %c0_i32 : i32
    %1 = arith.extui %0 : i1 to i32
    %c0_i32_0 = arith.constant 0 : i32
    %2 = arith.cmpi ne, %1, %c0_i32_0 : i32
    scf.if %2 {
      %cst_16 = arith.constant 0.000000e+00 : f32
      %18 = vector.broadcast %cst_16 : f32 to vector<32x1xf32>
      %c0_17 = arith.constant 0 : index
      %c0_18 = arith.constant 0 : index
      %19 = vector.load %arg4[%c0_17, %c0_18] : memref<32x1xf32, #tpu.memory_space<vmem>>, vector<32x1xf32>
      tpu.vector_store %arg4[%c0_17, %c0_18], %18 {strides = array<i32>} : memref<32x1xf32, #tpu.memory_space<vmem>>, vector<32x1xf32>,
      %cst_19 = arith.constant 0.000000e+00 : f32
      %20 = vector.broadcast %cst_19 : f32 to vector<32x1xf32>
      %c0_20 = arith.constant 0 : index
      %c0_21 = arith.constant 0 : index
      %21 = vector.load %arg5[%c0_20, %c0_21] : memref<32x1xf32, #tpu.memory_space<vmem>>, vector<32x1xf32>
      tpu.vector_store %arg5[%c0_20, %c0_21], %20 {strides = array<i32>} : memref<32x1xf32, #tpu.memory_space<vmem>>, vector<32x1xf32>,
    } else {
    }
    %c0 = arith.constant 0 : index
    %c0_1 = arith.constant 0 : index
    %3 = vector.load %arg1[%c0, %c0_1] : memref<32x36xf32, #tpu.memory_space<vmem>>, vector<32x36xf32>
    %c0_2 = arith.constant 0 : index
    %c0_3 = arith.constant 0 : index
    %4 = vector.load %arg2[%c0_2, %c0_3] : memref<36x512xf32, #tpu.memory_space<vmem>>, vector<36x512xf32>
    %cst = arith.constant dense<0.000000e+00> : vector<32x512xf32>
    %5 = tpu.matmul %3, %4, %cst {dimension_numbers = #tpu.dot_dimension_numbers<[1], [0], [0], [1], [0, 0, 1, 1], [], []>} : vector<32x36xf32>, vector<36x512xf32>, vector<32x512xf32> -> vector<32x512xf32>
    %c0_4 = arith.constant 0 : index
    %c0_5 = arith.constant 0 : index
    %6 = vector.load %arg3[%c0_4, %c0_5] : memref<32x512xf32, #tpu.memory_space<vmem>>, vector<32x512xf32>
    tpu.vector_store %arg3[%c0_4, %c0_5], %5 {strides = array<i32>} : memref<32x512xf32, #tpu.memory_space<vmem>>, vector<32x512xf32>,
    %c0_6 = arith.constant 0 : index
    %c0_7 = arith.constant 0 : index
    %7 = vector.load %arg4[%c0_6, %c0_7] : memref<32x1xf32, #tpu.memory_space<vmem>>, vector<32x1xf32>
    %cst_8 = arith.constant dense<0.000000e+00> : vector<32xf32>
    %8 = vector.multi_reduction <add>, %5, %cst_8 [1] : vector<32x512xf32> to vector<32xf32>
    %9 = vector.shape_cast %8 : vector<32xf32> to vector<32x1xf32>
    %10 = arith.addf %7, %9 : vector<32x1xf32>
    %c0_9 = arith.constant 0 : index
    %c0_10 = arith.constant 0 : index
    %11 = vector.load %arg4[%c0_9, %c0_10] : memref<32x1xf32, #tpu.memory_space<vmem>>, vector<32x1xf32>
    tpu.vector_store %arg4[%c0_9, %c0_10], %10 {strides = array<i32>} : memref<32x1xf32, #tpu.memory_space<vmem>>, vector<32x1xf32>,
    %c0_11 = arith.constant 0 : index
    %c0_12 = arith.constant 0 : index
    %12 = vector.load %arg5[%c0_11, %c0_12] : memref<32x1xf32, #tpu.memory_space<vmem>>, vector<32x1xf32>
    %13 = arith.mulf %5, %5 : vector<32x512xf32>
    %cst_13 = arith.constant dense<0.000000e+00> : vector<32xf32>
    %14 = vector.multi_reduction <add>, %13, %cst_13 [1] : vector<32x512xf32> to vector<32xf32>
    %15 = vector.shape_cast %14 : vector<32xf32> to vector<32x1xf32>
    %16 = arith.addf %12, %15 : vector<32x1xf32>
    %c0_14 = arith.constant 0 : index
    %c0_15 = arith.constant 0 : index
    %17 = vector.load %arg5[%c0_14, %c0_15] : memref<32x1xf32, #tpu.memory_space<vmem>>, vector<32x1xf32>
    tpu.vector_store %arg5[%c0_14, %c0_15], %16 {strides = array<i32>} : memref<32x1xf32, #tpu.memory_space<vmem>>, vector<32x1xf32>,
    return
  }
  func.func @transform_0(%arg0: i32) -> (i32, i32) {
    %c0_i32 = arith.constant 0 : i32
    %c0_i32_0 = arith.constant 0 : i32
    %c0_i32_1 = arith.constant 0 : i32
    return %c0_i32, %c0_i32_0 : i32, i32
  }
  func.func @transform_1(%arg0: i32) -> (i32, i32) {
    %c0_i32 = arith.constant 0 : i32
    %c0_i32_0 = arith.constant 0 : i32
    return %c0_i32, %arg0 : i32, i32
  }
  func.func @transform_2(%arg0: i32) -> (i32, i32) {
    %c0_i32 = arith.constant 0 : i32
    %c0_i32_0 = arith.constant 0 : i32
    return %c0_i32, %arg0 : i32, i32
  }
  func.func @transform_3(%arg0: i32) -> (i32, i32) {
    %c0_i32 = arith.constant 0 : i32
    %c0_i32_0 = arith.constant 0 : i32
    %c0_i32_1 = arith.constant 0 : i32
    return %c0_i32, %c0_i32_0 : i32, i32
  }
  func.func @transform_4(%arg0: i32) -> (i32, i32) {
    %c0_i32 = arith.constant 0 : i32
    %c0_i32_0 = arith.constant 0 : i32
    %c0_i32_1 = arith.constant 0 : i32
    return %c0_i32, %c0_i32_0 : i32, i32
  }
}

</mosaic_0001>

<llo_original>
// kernel: tpu_custom_call.1
$region0: #{tpu_custom_call.1}
  #allocation0 [shape = 'u32[]', space=smem, size = 0x4, offset = 0x4, fixed_abs, tag = 'smem constant byte address 0x4 - core index']
  #allocation1 [shape = 'u32[72,128]{1,0:T(1,128)}', space=vmem, size = 0x9000, scoped, tag = 'internal scratch']
  %s0 = inlined_call_operand.hbm [shape: f32[32,36], index: 0, kind: input, shape index: {}]
  %s1 = inlined_call_operand.hbm [shape: f32[36,512], index: 1, kind: input, shape index: {}]
  %s2 = inlined_call_operand.hbm [shape: f32[32,512], index: 2, kind: output, shape index: {0}]
  %s3 = inlined_call_operand.vmem [shape: f32[32,1], index: 3, kind: output, shape index: {1}]
  %s4 = inlined_call_operand.vmem [shape: f32[32,1], index: 4, kind: output, shape index: {2}]
  %5 = xla_tuple %s2, %s3, %s4
  %s6 = sld [smem:[#allocation0]]
  $region46: #{tpu_custom_call.1} parent=0
    _
  %s8 = ssub.s32 1, %s6
  %s9 = scalar_select 0, %s8, %s6
  $region1: #{tpu_custom_call.1} parent=0
    #allocation2 [shape = 'u8[16384]{0}', space=vmem, size = 0x4000, scoped, tag = 'input window, operand 0, single buffered']
    #allocation3 [shape = 's32[1]{0}', space=sflag, size = 0x4, scoped, tag = 'scoped memory for tpu_custom_call.1']
    #allocation4 [shape = 's32[1]{0}', space=sflag, size = 0x4, scoped, tag = 'scoped memory for tpu_custom_call.1']
    #allocation5 [shape = 'u8[81920]{0}', space=vmem, size = 0x14000, scoped, tag = 'input window, operand 1, single buffered']
    #allocation6 [shape = 's32[1]{0}', space=sflag, size = 0x4, scoped, tag = 'scoped memory for tpu_custom_call.1']
    #allocation7 [shape = 'u8[65536]{0}', space=vmem, size = 0x10000, scoped, tag = 'output window, operand 0, single buffered']
    %10 = vsyncpa [#allocation3], 0
    %11 = vsyncpa [#allocation6], 0
    %12 = vsyncpa [#allocation4], 0
    // Predicated region
    $region2: #{tpu_custom_call.1} parent=1 // pred_check
      _
    $region3: #{tpu_custom_call.1} parent=1 // pred_check_branch
      %14 = sbr.rel (0) target = $region5
    $region4: #{tpu_custom_call.1} parent=1 // pred_region
      %16 = vsyncadd [#allocation3], 0
      %s17 = sshll.u32 %s0, 4
      %s18 = int_to_ptr.hbm [resolvable:$true] %s17
      %s19 = sshll.u32 [#allocation2], 4
      %s20 = int_to_ptr.vmem [resolvable:$true] %s19
      %25 = dma.hbm_to_vmem [thread:$0]  %s18, 512, %s20, [#allocation3], 128, 128, 8
    $region5: #{tpu_custom_call.1} parent=1 // pred_fallthru
      _
    // Predicated region
    $region6: #{tpu_custom_call.1} parent=1 // pred_check
      _
    $region7: #{tpu_custom_call.1} parent=1 // pred_check_branch
      %27 = sbr.rel (0) target = $region9
    $region8: #{tpu_custom_call.1} parent=1 // pred_region
      %29 = vsyncadd [#allocation6], 0
      %s30 = sshll.u32 %s1, 4
      %s31 = int_to_ptr.hbm [resolvable:$true] %s30
      %s32 = sshll.u32 [#allocation5], 4
      %s33 = int_to_ptr.vmem [resolvable:$true] %s32
      %38 = dma.hbm_to_vmem [thread:$0]  %s31, 2560, %s33, [#allocation6], 512, 512, 32
    $region9: #{tpu_custom_call.1} parent=1 // pred_fallthru
      _
    // Predicated region
    $region10: #{tpu_custom_call.1} parent=1 // pred_check
      _
    $region11: #{tpu_custom_call.1} parent=1 // pred_check_branch
      %40 = sbr.rel (0) target = $region13
    $region12: #{tpu_custom_call.1} parent=1 // pred_region
      %42 = dma.done [#allocation3], 512
    $region13: #{tpu_custom_call.1} parent=1 // pred_fallthru
      _
    // Predicated region
    $region14: #{tpu_custom_call.1} parent=1 // pred_check
      _
    $region15: #{tpu_custom_call.1} parent=1 // pred_check_branch
      %44 = sbr.rel (0) target = $region17
    $region16: #{tpu_custom_call.1} parent=1 // pred_region
      %46 = dma.done [#allocation6], 2560
    $region17: #{tpu_custom_call.1} parent=1 // pred_fallthru
      _
    %p47 = scmp.eq.s32.totalorder 0, 0
    // Predicated region
    $region18: #{tpu_custom_call.1} parent=1 // pred_check
      %p48 = pneg %p47
    $region19: #{tpu_custom_call.1} parent=1 // pred_check_branch
      %50 = sbr.rel (%p48) target = $region21
    $region20: #{tpu_custom_call.1} parent=1 // pred_region
      %vm51 = vcmask 7168
      %52 = vst.msk [vmem:[%s3] sm:$0xff] %vm51, 0.0
      %53 = vst.msk [vmem:[%s3 + $0x8] sm:$0xff] %vm51, 0.0
      %54 = vst.msk [vmem:[%s3 + $0x10] sm:$0xff] %vm51, 0.0
      %55 = vst.msk [vmem:[%s3 + $0x18] sm:$0xff] %vm51, 0.0
      %56 = vst.msk [vmem:[%s4] sm:$0xff] %vm51, 0.0
      %57 = vst.msk [vmem:[%s4 + $0x8] sm:$0xff] %vm51, 0.0
      %58 = vst.msk [vmem:[%s4 + $0x10] sm:$0xff] %vm51, 0.0
      %59 = vst.msk [vmem:[%s4 + $0x18] sm:$0xff] %vm51, 0.0
    $region21: #{tpu_custom_call.1} parent=1 // pred_fallthru
      _
    %v60 = vld [vmem:[#allocation2] sm:$0xff]
    %v61 = vld [vmem:[#allocation2 + $0x8] sm:$0xff]
    %v62 = vld [vmem:[#allocation2 + $0x10] sm:$0xff]
    %v63 = vld [vmem:[#allocation2 + $0x18] sm:$0xff]
    %v64 = vld [vmem:[#allocation5] sm:$0xff]
    %v65 = vld [vmem:[#allocation5 + $0x8] sm:$0xff]
    %v66 = vld [vmem:[#allocation5 + $0x10] sm:$0xff]
    %v67 = vld [vmem:[#allocation5 + $0x18] sm:$0xff]
    %v68 = vld [vmem:[#allocation5 + $0x20] sm:$0xff]
    %v69 = vld [vmem:[#allocation5 + $0x28] sm:$0xff]
    %v70 = vld [vmem:[#allocation5 + $0x30] sm:$0xff]
    %v71 = vld [vmem:[#allocation5 + $0x38] sm:$0xff]
    %v72 = vld [vmem:[#allocation5 + $0x40] sm:$0xff]
    %v73 = vld [vmem:[#allocation5 + $0x48] sm:$0xff]
    %v74 = vld [vmem:[#allocation5 + $0x50] sm:$0xff]
    %v75 = vld [vmem:[#allocation5 + $0x58] sm:$0xff]
    %v76 = vld [vmem:[#allocation5 + $0x60] sm:$0xff]
    %v77 = vld [vmem:[#allocation5 + $0x68] sm:$0xff]
    %v78 = vld [vmem:[#allocation5 + $0x70] sm:$0xff]
    %v79 = vld [vmem:[#allocation5 + $0x78] sm:$0xff]
    %v80 = vld [vmem:[#allocation5 + $0x80] sm:$0xf]
    %v81 = vld [vmem:[#allocation5 + $0x88] sm:$0xf]
    %v82 = vld [vmem:[#allocation5 + $0x90] sm:$0xf]
    %v83 = vld [vmem:[#allocation5 + $0x98] sm:$0xf]
    %vm84 = vcmask 293888
    %v86 = vsel %vm84, %v60, 0
    %v89 = vsel %vm84, %v61, 0
    %v92 = vsel %vm84, %v62, 0
    %v95 = vsel %vm84, %v63, 0
    %vm97 = vcmask 1043456
    %v99 = vsel %vm97, %v80, 0
    %v102 = vsel %vm97, %v81, 0
    %v105 = vsel %vm97, %v82, 0
    %v108 = vsel %vm97, %v83, 0
    %110 = vmatpush.msra.mxu0 0.0
    %111 = vmatpush.msra.mxu0 0.0
    %112 = vmatpush.msra.mxu0 0.0
    %113 = vmatpush.msra.mxu0 0.0
    %114 = vmatpush.msra.mxu0 0.0
    %115 = vmatpush.msra.mxu0 0.0
    %116 = vmatpush.msra.mxu0 0.0
    %117 = vmatpush.msra.mxu0 0.0
    %118 = vmatpush.msra.mxu0 0.0
    %119 = vmatpush.msra.mxu0 0.0
    %120 = vmatpush.msra.mxu0 0.0
    %121 = vmatpush.msra.mxu0 %v99
    %122 = vmatpush.msra.mxu0 %v76
    %123 = vmatpush.msra.mxu0 %v72
    %124 = vmatpush.msra.mxu0 %v68
    %125 = vmatpush.msra.mxu0 %v64
    %126 = vmatmul.f32.gmra.mxu0 %v86
    %v127 = vpop.f32.mrf.mxu0
    %v128 = vadd.f32 0.0, %v127
    %129 = vmatmul.f32.gmra.mxu0 %v89
    %v130 = vpop.f32.mrf.mxu0
    %v131 = vadd.f32 0.0, %v130
    %132 = vmatmul.f32.gmra.mxu0 %v92
    %v133 = vpop.f32.mrf.mxu0
    %v134 = vadd.f32 0.0, %v133
    %135 = vmatmul.f32.gmra.mxu0 %v95
    %v136 = vpop.f32.mrf.mxu0
    %v137 = vadd.f32 0.0, %v136
    %138 = vdwg.mxu0
    %139 = vmatpush.msra.mxu0 0.0
    %140 = vmatpush.msra.mxu0 0.0
    %141 = vmatpush.msra.mxu0 0.0
    %142 = vmatpush.msra.mxu0 0.0
    %143 = vmatpush.msra.mxu0 0.0
    %144 = vmatpush.msra.mxu0 0.0
    %145 = vmatpush.msra.mxu0 0.0
    %146 = vmatpush.msra.mxu0 0.0
    %147 = vmatpush.msra.mxu0 0.0
    %148 = vmatpush.msra.mxu0 0.0
    %149 = vmatpush.msra.mxu0 0.0
    %150 = vmatpush.msra.mxu0 %v102
    %151 = vmatpush.msra.mxu0 %v77
    %152 = vmatpush.msra.mxu0 %v73
    %153 = vmatpush.msra.mxu0 %v69
    %154 = vmatpush.msra.mxu0 %v65
    %155 = vmatmul.f32.gmra.mxu0 %v86
    %v156 = vpop.f32.mrf.mxu0
    %v157 = vadd.f32 0.0, %v156
    %158 = vmatmul.f32.gmra.mxu0 %v89
    %v159 = vpop.f32.mrf.mxu0
    %v160 = vadd.f32 0.0, %v159
    %161 = vmatmul.f32.gmra.mxu0 %v92
    %v162 = vpop.f32.mrf.mxu0
    %v163 = vadd.f32 0.0, %v162
    %164 = vmatmul.f32.gmra.mxu0 %v95
    %v165 = vpop.f32.mrf.mxu0
    %v166 = vadd.f32 0.0, %v165
    %167 = vdwg.mxu0
    %168 = vmatpush.msra.mxu0 0.0
    %169 = vmatpush.msra.mxu0 0.0
    %170 = vmatpush.msra.mxu0 0.0
    %171 = vmatpush.msra.mxu0 0.0
    %172 = vmatpush.msra.mxu0 0.0
    %173 = vmatpush.msra.mxu0 0.0
    %174 = vmatpush.msra.mxu0 0.0
    %175 = vmatpush.msra.mxu0 0.0
    %176 = vmatpush.msra.mxu0 0.0
    %177 = vmatpush.msra.mxu0 0.0
    %178 = vmatpush.msra.mxu0 0.0
    %179 = vmatpush.msra.mxu0 %v105
    %180 = vmatpush.msra.mxu0 %v78
    %181 = vmatpush.msra.mxu0 %v74
    %182 = vmatpush.msra.mxu0 %v70
    %183 = vmatpush.msra.mxu0 %v66
    %184 = vmatmul.f32.gmra.mxu0 %v86
    %v185 = vpop.f32.mrf.mxu0
    %v186 = vadd.f32 0.0, %v185
    %187 = vmatmul.f32.gmra.mxu0 %v89
    %v188 = vpop.f32.mrf.mxu0
    %v189 = vadd.f32 0.0, %v188
    %190 = vmatmul.f32.gmra.mxu0 %v92
    %v191 = vpop.f32.mrf.mxu0
    %v192 = vadd.f32 0.0, %v191
    %193 = vmatmul.f32.gmra.mxu0 %v95
    %v194 = vpop.f32.mrf.mxu0
    %v195 = vadd.f32 0.0, %v194
    %196 = vdwg.mxu0
    %197 = vmatpush.msra.mxu0 0.0
    %198 = vmatpush.msra.mxu0 0.0
    %199 = vmatpush.msra.mxu0 0.0
    %200 = vmatpush.msra.mxu0 0.0
    %201 = vmatpush.msra.mxu0 0.0
    %202 = vmatpush.msra.mxu0 0.0
    %203 = vmatpush.msra.mxu0 0.0
    %204 = vmatpush.msra.mxu0 0.0
    %205 = vmatpush.msra.mxu0 0.0
    %206 = vmatpush.msra.mxu0 0.0
    %207 = vmatpush.msra.mxu0 0.0
    %208 = vmatpush.msra.mxu0 %v108
    %209 = vmatpush.msra.mxu0 %v79
    %210 = vmatpush.msra.mxu0 %v75
    %211 = vmatpush.msra.mxu0 %v71
    %212 = vmatpush.msra.mxu0 %v67
    %213 = vmatmul.f32.gmra.mxu0 %v86
    %v214 = vpop.f32.mrf.mxu0
    %v215 = vadd.f32 0.0, %v214
    %216 = vmatmul.f32.gmra.mxu0 %v89
    %v217 = vpop.f32.mrf.mxu0
    %v218 = vadd.f32 0.0, %v217
    %219 = vmatmul.f32.gmra.mxu0 %v92
    %v220 = vpop.f32.mrf.mxu0
    %v221 = vadd.f32 0.0, %v220
    %222 = vmatmul.f32.gmra.mxu0 %v95
    %v223 = vpop.f32.mrf.mxu0
    %v224 = vadd.f32 0.0, %v223
    %225 = vdwg.mxu0
    %226 = vst [vmem:[#allocation7] sm:$0xff] %v128
    %227 = vst [vmem:[#allocation7 + $0x8] sm:$0xff] %v157
    %228 = vst [vmem:[#allocation7 + $0x10] sm:$0xff] %v186
    %229 = vst [vmem:[#allocation7 + $0x18] sm:$0xff] %v215
    %230 = vst [vmem:[#allocation7 + $0x20] sm:$0xff] %v131
    %231 = vst [vmem:[#allocation7 + $0x28] sm:$0xff] %v160
    %232 = vst [vmem:[#allocation7 + $0x30] sm:$0xff] %v189
    %233 = vst [vmem:[#allocation7 + $0x38] sm:$0xff] %v218
    %234 = vst [vmem:[#allocation7 + $0x40] sm:$0xff] %v134
    %235 = vst [vmem:[#allocation7 + $0x48] sm:$0xff] %v163
    %236 = vst [vmem:[#allocation7 + $0x50] sm:$0xff] %v192
    %237 = vst [vmem:[#allocation7 + $0x58] sm:$0xff] %v221
    %238 = vst [vmem:[#allocation7 + $0x60] sm:$0xff] %v137
    %239 = vst [vmem:[#allocation7 + $0x68] sm:$0xff] %v166
    %240 = vst [vmem:[#allocation7 + $0x70] sm:$0xff] %v195
    %241 = vst [vmem:[#allocation7 + $0x78] sm:$0xff] %v224
    %v242 = vld [vmem:[%s3] sm:$0xff]
    %v243 = vld [vmem:[%s3 + $0x8] sm:$0xff]
    %v244 = vld [vmem:[%s3 + $0x10] sm:$0xff]
    %v245 = vld [vmem:[%s3 + $0x18] sm:$0xff]
    %v246 = vadd.f32 %v128, %v157
    %v247 = vadd.f32 %v246, %v186
    %v248 = vadd.f32 %v247, %v215
    %249 = vadd.xlane.f32.xlu0 %v248
    %v250 = vpop.xlane.xlu0 %249
    %v251 = vadd.f32 %v131, %v160
    %v252 = vadd.f32 %v251, %v189
    %v253 = vadd.f32 %v252, %v218
    %254 = vadd.xlane.f32.xlu0 %v253
    %v255 = vpop.xlane.xlu0 %254
    %v256 = vadd.f32 %v134, %v163
    %v257 = vadd.f32 %v256, %v192
    %v258 = vadd.f32 %v257, %v221
    %259 = vadd.xlane.f32.xlu0 %v258
    %v260 = vpop.xlane.xlu0 %259
    %v261 = vadd.f32 %v137, %v166
    %v262 = vadd.f32 %v261, %v195
    %v263 = vadd.f32 %v262, %v224
    %264 = vadd.xlane.f32.xlu0 %v263
    %v265 = vpop.xlane.xlu0 %264
    %v266 = vadd.f32 %v242, %v250
    %v267 = vadd.f32 %v243, %v255
    %v268 = vadd.f32 %v244, %v260
    %v269 = vadd.f32 %v245, %v265
    %vm270 = vcmask 7168
    %271 = vst.msk [vmem:[%s3] sm:$0xff] %vm270, %v266
    %272 = vst.msk [vmem:[%s3 + $0x8] sm:$0xff] %vm270, %v267
    %273 = vst.msk [vmem:[%s3 + $0x10] sm:$0xff] %vm270, %v268
    %274 = vst.msk [vmem:[%s3 + $0x18] sm:$0xff] %vm270, %v269
    %v275 = vld [vmem:[%s4] sm:$0xff]
    %v276 = vld [vmem:[%s4 + $0x8] sm:$0xff]
    %v277 = vld [vmem:[%s4 + $0x10] sm:$0xff]
    %v278 = vld [vmem:[%s4 + $0x18] sm:$0xff]
    %v279 = vmul.f32 %v128, %v128
    %v280 = vmul.f32 %v157, %v157
    %v281 = vmul.f32 %v186, %v186
    %v282 = vmul.f32 %v215, %v215
    %v283 = vmul.f32 %v131, %v131
    %v284 = vmul.f32 %v160, %v160
    %v285 = vmul.f32 %v189, %v189
    %v286 = vmul.f32 %v218, %v218
    %v287 = vmul.f32 %v134, %v134
    %v288 = vmul.f32 %v163, %v163
    %v289 = vmul.f32 %v192, %v192
    %v290 = vmul.f32 %v221, %v221
    %v291 = vmul.f32 %v137, %v137
    %v292 = vmul.f32 %v166, %v166
    %v293 = vmul.f32 %v195, %v195
    %v294 = vmul.f32 %v224, %v224
    %v295 = vadd.f32 %v279, %v280
    %v296 = vadd.f32 %v295, %v281
    %v297 = vadd.f32 %v296, %v282
    %298 = vadd.xlane.f32.xlu0 %v297
    %v299 = vpop.xlane.xlu0 %298
    %v300 = vadd.f32 %v283, %v284
    %v301 = vadd.f32 %v300, %v285
    %v302 = vadd.f32 %v301, %v286
    %303 = vadd.xlane.f32.xlu0 %v302
    %v304 = vpop.xlane.xlu0 %303
    %v305 = vadd.f32 %v287, %v288
    %v306 = vadd.f32 %v305, %v289
    %v307 = vadd.f32 %v306, %v290
    %308 = vadd.xlane.f32.xlu0 %v307
    %v309 = vpop.xlane.xlu0 %308
    %v310 = vadd.f32 %v291, %v292
    %v311 = vadd.f32 %v310, %v293
    %v312 = vadd.f32 %v311, %v294
    %313 = vadd.xlane.f32.xlu0 %v312
    %v314 = vpop.xlane.xlu0 %313
    %v315 = vadd.f32 %v275, %v299
    %v316 = vadd.f32 %v276, %v304
    %v317 = vadd.f32 %v277, %v309
    %v318 = vadd.f32 %v278, %v314
    %319 = vst.msk [vmem:[%s4] sm:$0xff] %vm270, %v315
    %320 = vst.msk [vmem:[%s4 + $0x8] sm:$0xff] %vm270, %v316
    %321 = vst.msk [vmem:[%s4 + $0x10] sm:$0xff] %vm270, %v317
    %322 = vst.msk [vmem:[%s4 + $0x18] sm:$0xff] %vm270, %v318
    // Predicated region
    $region22: #{tpu_custom_call.1} parent=1 // pred_check
      _
    $region23: #{tpu_custom_call.1} parent=1 // pred_check_branch
      %324 = sbr.rel (0) target = $region25
    $region24: #{tpu_custom_call.1} parent=1 // pred_region
      %326 = vsyncadd [#allocation4], 0
      %s327 = sshll.u32 [#allocation7], 4
      %s328 = int_to_ptr.vmem [resolvable:$true] %s327
      %s329 = sshll.u32 %s2, 4
      %s330 = int_to_ptr.hbm [resolvable:$true] %s329
      %335 = dma.vmem_to_hbm [thread:$0]  %s328, 2048, %s330, [#allocation4], 512, 512, 32
    $region25: #{tpu_custom_call.1} parent=1 // pred_fallthru
      _
    // Predicated region
    $region26: #{tpu_custom_call.1} parent=1 // pred_check
      _
    $region27: #{tpu_custom_call.1} parent=1 // pred_check_branch
      %337 = sbr.rel (0) target = $region29
    $region28: #{tpu_custom_call.1} parent=1 // pred_region
      _
    $region29: #{tpu_custom_call.1} parent=1 // pred_fallthru
      _
    // Predicated region
    $region30: #{tpu_custom_call.1} parent=1 // pred_check
      _
    $region31: #{tpu_custom_call.1} parent=1 // pred_check_branch
      %339 = sbr.rel (0) target = $region33
    $region32: #{tpu_custom_call.1} parent=1 // pred_region
      _
    $region33: #{tpu_custom_call.1} parent=1 // pred_fallthru
      _
    // Predicated region
    $region34: #{tpu_custom_call.1} parent=1 // pred_check
      _
    $region35: #{tpu_custom_call.1} parent=1 // pred_check_branch
      %341 = sbr.rel (0) target = $region37
    $region36: #{tpu_custom_call.1} parent=1 // pred_region
      %343 = dma.done [#allocation4], 2048
    $region37: #{tpu_custom_call.1} parent=1 // pred_fallthru
      _
    // Predicated region
    $region38: #{tpu_custom_call.1} parent=1 // pred_check
      _
    $region39: #{tpu_custom_call.1} parent=1 // pred_check_branch
      %345 = sbr.rel (0) target = $region41
    $region40: #{tpu_custom_call.1} parent=1 // pred_region
      _
    $region41: #{tpu_custom_call.1} parent=1 // pred_fallthru
      _
    // Predicated region
    $region42: #{tpu_custom_call.1} parent=1 // pred_check
      _
    $region43: #{tpu_custom_call.1} parent=1 // pred_check_branch
      %347 = sbr.rel (0) target = $region45
    $region44: #{tpu_custom_call.1} parent=1 // pred_region
      _
    $region45: #{tpu_custom_call.1} parent=1 // pred_fallthru
      _
    %348 = vsyncpa [#allocation3], 1
    %349 = vsyncpa [#allocation6], 1
    %350 = vsyncpa [#allocation4], 1

</llo_original>
